<compile_context>
chip_gen: v7x
topology: tpu7x:2x2x1
jax: 0.10.0
libtpu: 0.0.40
codegen_flags: <defaults>
</compile_context>

<pallas_src>
import numpy as np
import jax
import jax.numpy as jnp
from jax.experimental import pallas as pl
from jax.experimental.pallas import tpu as pltpu


def _round_up(n, m):
    return ((n + m - 1) // m) * m


def _full_spec(shape):
    n = len(shape)
    return pl.BlockSpec(shape, lambda *_, _n=n: (0,) * _n)


# ----------------- one-time parameter preparation (bf16 casts, stacking) -----------------
def prepare_decoder_params(params):
    L = len(params["lstm"])
    prep = {
        "embed": params["embed"],                                   # f32 (gather + LN in f32)
        "ln_g": params["ln_g"].reshape(1, -1).astype(jnp.float32),
        "ln_b": params["ln_b"].reshape(1, -1).astype(jnp.float32),
        "wih0": params["lstm"][0]["wih"].astype(jnp.bfloat16),
        "whh0": params["lstm"][0]["whh"].astype(jnp.bfloat16),
        "bias0": params["lstm"][0]["bias"].reshape(1, -1).astype(jnp.float32),
        "lin_w": params["lin_w"].astype(jnp.bfloat16),
        "lin_b": params["lin_b"].reshape(1, -1).astype(jnp.float32),
        "num_layers": L,
        "hidden": params["lstm"][0]["whh"].shape[0],
        "embed_dim": params["embed"].shape[-1],
        "vocab": params["lin_w"].shape[-1],
    }
    if L > 1:   # stacked once here, NOT per forward call; no dummy arrays when L == 1
        prep["wih_rest"] = jnp.stack(
            [params["lstm"][l]["wih"] for l in range(1, L)]).astype(jnp.bfloat16)
        prep["whh_rest"] = jnp.stack(
            [params["lstm"][l]["whh"] for l in range(1, L)]).astype(jnp.bfloat16)
        prep["brest"] = jnp.stack(
            [params["lstm"][l]["bias"].reshape(1, -1) for l in range(1, L)]).astype(jnp.float32)
    return prep


# --------- Kernel A: LayerNorm + hoisted layer-0 input projection (time-tiled) ---------
def _prep_kernel(feat_ref, emb_ref, g_ref, b_ref, w_ref, bias_ref, gx_ref):
    w = w_ref[...]            # bf16 (E, 4H), constant block -> stays resident
    bias = bias_ref[...]      # f32  (1, 4H)

    @pl.when(pl.program_id(0) == 0)
    def _():                  # t == 0: the image feature is NOT layer-normalised
        gx_ref[0] = jnp.dot(feat_ref[0].astype(jnp.bfloat16), w,
                            preferred_element_type=jnp.float32) + bias

    @pl.when(pl.program_id(0) != 0)
    def _():                  # t >= 1: LayerNorm(embedding) then projection
        e = emb_ref[0]
        mu = jnp.mean(e, axis=-1, keepdims=True)
        var = jnp.mean((e - mu) ** 2, axis=-1, keepdims=True)      # biased var (torch)
        e_n = (e - mu) * jax.lax.rsqrt(var + 1e-6) * g_ref[...] + b_ref[...]
        gx_ref[0] = jnp.dot(e_n.astype(jnp.bfloat16), w,
                            preferred_element_type=jnp.float32) + bias


def prep_input_gates(prep, feat3, emb_tm, Tp):
    _, B_p, E = feat3.shape
    G = prep["wih0"].shape[-1]
    return pl.pallas_call(
        _prep_kernel,
        out_shape=jax.ShapeDtypeStruct((Tp, B_p, G), jnp.float32),
        grid=(Tp,),
        in_specs=[pl.BlockSpec((1, B_p, E), lambda t: (0, 0, 0)),
                  pl.BlockSpec((1, B_p, E), lambda t: (jnp.maximum(t - 1, 0), 0, 0)),
                  pl.BlockSpec((1, E), lambda t: (0, 0)),
                  pl.BlockSpec((1, E), lambda t: (0, 0)),
                  pl.BlockSpec((E, G), lambda t: (0, 0)),
                  pl.BlockSpec((1, G), lambda t: (0, 0))],
        out_specs=pl.BlockSpec((1, B_p, G), lambda t: (t, 0, 0)),
        compiler_params=pltpu.CompilerParams(dimension_semantics=("parallel",)),
    )(feat3, emb_tm, prep["ln_g"], prep["ln_b"], prep["wih0"], prep["bias0"])


# ------- Kernel B: fused multi-layer LSTM recurrence (all timesteps, one call) -------
def _make_lstm_kernel(num_layers, hidden):
    L, H = num_layers, hidden

    def kernel(*refs):
        if L > 1:
            (len_ref, gx_ref, whh0_ref, wihr_ref, whhr_ref, brest_ref,
             h0_ref, c0_ref, hseq_ref, hn_ref, cn_ref) = refs
        else:
            (len_ref, gx_ref, whh0_ref,
             h0_ref, c0_ref, hseq_ref, hn_ref, cn_ref) = refs

        Tp = gx_ref.shape[0]
        len_vec = len_ref[...]                           # (B, 1) int32, loaded once
        # weight loads hoisted OUT of the (partially unrolled) loop body
        whh0 = whh0_ref[...]                             # bf16 (H, 4H)
        if L > 1:
            wih_l = [wihr_ref[l] for l in range(L - 1)]
            whh_l = [whhr_ref[l] for l in range(L - 1)]
            b_l = [brest_ref[l] for l in range(L - 1)]

        def cell(gates, c_prev):                         # PyTorch gate order i, f, g, o
            i_g = jax.nn.sigmoid(gates[:, 0 * H:1 * H])
            f_g = jax.nn.sigmoid(gates[:, 1 * H:2 * H])
            g_g = jnp.tanh(gates[:, 2 * H:3 * H])
            o_g = jax.nn.sigmoid(gates[:, 3 * H:4 * H])
            c_new = f_g * c_prev + i_g * g_g
            return o_g * jnp.tanh(c_new), c_new

        def step(t, carry):
            hs, cs = carry
            m = t < len_vec                              # (B, 1) freeze mask (packed-seq)
            new_hs, new_cs = [], []
            # layer 0: X @ W_ih already hoisted; only h @ W_hh on the serial path
            gates = gx_ref[t] + jnp.dot(hs[0].astype(jnp.bfloat16), whh0,
                                        preferred_element_type=jnp.float32)
            h_nw, c_nw = cell(gates, cs[0])
            new_hs.append(jnp.where(m, h_nw, hs[0]))
            new_cs.append(jnp.where(m, c_nw, cs[0]))
            # layers >= 1: two MXU dots into one f32 accumulator (no per-step concat)
            for l in range(1, L):
                gates = (jnp.dot(new_hs[l - 1].astype(jnp.bfloat16), wih_l[l - 1],
                                 preferred_element_type=jnp.float32)
                         + jnp.dot(hs[l].astype(jnp.bfloat16), whh_l[l - 1],
                                   preferred_element_type=jnp.float32)
                         + b_l[l - 1])
                h_nw, c_nw = cell(gates, cs[l])
                new_hs.append(jnp.where(m, h_nw, hs[l]))
                new_cs.append(jnp.where(m, c_nw, cs[l]))
            hseq_ref[t] = new_hs[-1].astype(hseq_ref.dtype)     # bf16, lane-dense
            return tuple(new_hs), tuple(new_cs)

        init = (tuple(h0_ref[l] for l in range(L)),
                tuple(c0_ref[l] for l in range(L)))
        hs_f, cs_f = jax.lax.fori_loop(0, Tp, step, init, unroll=min(Tp, 8))

        # final state written once; the freeze mask makes this the state at each
        # sequence's last valid step (matches packed-LSTM h_n / c_n).
        for l in range(L):
            hn_ref[l] = hs_f[l]
            cn_ref[l] = cs_f[l]

    return kernel


def fused_lstm(prep, lengths_col, gx, h0, c0):
    Tp, B_p, _ = gx.shape
    H, L = prep["hidden"], prep["num_layers"]
    kernel = _make_lstm_kernel(L, H)
    args = [lengths_col, gx, prep["whh0"]]
    if L > 1:
        args += [prep["wih_rest"], prep["whh_rest"], prep["brest"]]
    args += [h0, c0]
    in_specs = [_full_spec(a.shape) for a in args]
    return pl.pallas_call(
        kernel,
        out_shape=(jax.ShapeDtypeStruct((Tp, B_p, H), jnp.bfloat16),
                   jax.ShapeDtypeStruct((L, B_p, H), jnp.float32),
                   jax.ShapeDtypeStruct((L, B_p, H), jnp.float32)),
        grid=(1,),
        in_specs=in_specs,
        out_specs=(_full_spec((Tp, B_p, H)),
                   _full_spec((L, B_p, H)),
                   _full_spec((L, B_p, H))),
        compiler_params=pltpu.CompilerParams(
            dimension_semantics=("arbitrary",),
            vmem_limit_bytes=64 * 1024 * 1024),
    )(*args)


# --------------------- Kernel C: final Linear (rows x vocab tiled) ---------------------
def _linear_kernel(x_ref, w_ref, b_ref, o_ref):
    o_ref[...] = (jnp.dot(x_ref[...], w_ref[...], preferred_element_type=jnp.float32)
                  + b_ref[...]).astype(o_ref.dtype)


def linear_packed(x_bf16, w_bf16, b_f32):
    N, H = x_bf16.shape
    V = w_bf16.shape[-1]
    tv = V
    for cand in (1024, 512, 256, 128):
        if V % cand == 0:
            tv = cand
            break
    tr = 256 if (N >= 256 and N % 256 == 0) else N     # caller pads N appropriately
    return pl.pallas_call(
        _linear_kernel,
        out_shape=jax.ShapeDtypeStruct((N, V), jnp.float32),
        grid=(N // tr, V // tv),                        # vocab fastest -> x tile resident
        in_specs=[pl.BlockSpec((tr, H), lambda i, j: (i, 0)),
                  pl.BlockSpec((H, tv), lambda i, j: (0, j)),
                  pl.BlockSpec((1, tv), lambda i, j: (0, j))],
        out_specs=pl.BlockSpec((tr, tv), lambda i, j: (i, j)),
        compiler_params=pltpu.CompilerParams(dimension_semantics=("parallel", "parallel")),
    )(x_bf16, w_bf16, b_f32)


# ----------------------- pack_padded_sequence row ordering -----------------------
def _packed_row_indices(lengths_np, b_stride):
    # lengths are host-known (same contract as torch pack_padded_sequence).
    lengths_np = np.asarray(lengths_np)
    order = np.argsort(-lengths_np, kind="stable")             # descending length
    max_len = int(lengths_np.max())
    valid = lengths_np[order][None, :] > np.arange(max_len)[:, None]    # (Tmax, B)
    t_idx, pos = np.nonzero(valid)                             # row-major == packed order
    return (t_idx * b_stride + order[pos]).astype(np.int32)    # rows of (Tp*B_p, .) layout


# -------------------------- DecoderRNN forward (glue) ----------------------------
def decoder_rnn_forward(prep, features, captions, lengths_np, prev_state):
    """Mirrors DecoderRNN_Word.forward (eval). Returns (packed_logits (N,V), (h_n, c_n))."""
    B, T = captions.shape
    H, L = prep["hidden"], prep["num_layers"]
    Tp = T + 1
    B_p = _round_up(max(B, 8), 8)          # MXU/sublane friendly batch
    pad = B_p - B
    lengths_np = np.asarray(lengths_np).astype(np.int32)

    # batch padding: padded sequences have length 0 -> frozen at h0/c0, never packed.
    feat_p = jnp.pad(features, ((0, pad), (0, 0)))
    cap_p = jnp.pad(captions, ((0, pad), (0, 0)))
    h0 = jnp.pad(prev_state[0], ((0, 0), (0, pad), (0, 0)))
    c0 = jnp.pad(prev_state[1], ((0, 0), (0, pad), (0, 0)))
    len_col = jnp.asarray(np.pad(lengths_np, (0, pad)), jnp.int32).reshape(B_p, 1)

    # embedding lookup directly in time-major order (XLA gather; glue)
    emb_tm = prep["embed"][cap_p.T]                              # (T, B_p, E) f32

    # Kernel A: LayerNorm + hoisted layer-0 input projection, t==0 handled in-kernel
    gx = prep_input_gates(prep, feat_p[None], emb_tm, Tp)        # (Tp, B_p, 4H) f32

    # Kernel B: all Tp timesteps x all LSTM layers in ONE kernel invocation
    hseq, h_n, c_n = fused_lstm(prep, len_col, gx, h0, c0)       # hseq bf16

    # dropout(p=0.1) is identity in eval mode.
    # packed-row gather BEFORE the vocab projection (H-wide bf16 rows only).
    flat_idx = jnp.asarray(_packed_row_indices(lengths_np, B_p))
    packed_h = jnp.take(hseq.reshape(Tp * B_p, H), flat_idx, axis=0)
    N = packed_h.shape[0]
    tr = 256 if N >= 256 else _round_up(N, 8)
    N_pad = _round_up(N, tr)
    if N_pad != N:
        packed_h = jnp.pad(packed_h, ((0, N_pad - N), (0, 0)))

    logits = linear_packed(packed_h, prep["lin_w"], prep["lin_b"])[:N]
    return logits, (h_n[:, :B], c_n[:, :B])


# ------------------------------ pure-JAX reference -------------------------------
def _reference_forward(params, features, captions, lengths_np, prev_state):
    B, T = captions.shape
    H = params["lstm"][0]["whh"].shape[0]
    L = len(params["lstm"])
    emb = params["embed"][captions]                               # (B, T, E)
    mu = jnp.mean(emb, -1, keepdims=True)
    var = jnp.mean((emb - mu) ** 2, -1, keepdims=True)
    emb = (emb - mu) * jax.lax.rsqrt(var + 1e-6) * params["ln_g"] + params["ln_b"]
    x = jnp.concatenate([features[:, None, :], emb], axis=1)      # (B, Tp, E)
    lengths = jnp.asarray(np.asarray(lengths_np))
    h = [prev_state[0][l] for l in range(L)]
    c = [prev_state[1][l] for l in range(L)]
    outs = []
    for t in range(T + 1):
        m = (t < lengths)[:, None].astype(jnp.float32)
        inp = x[:, t, :]
        for l in range(L):
            p = params["lstm"][l]
            g = inp @ p["wih"] + h[l] @ p["whh"] + p["bias"]
            i_g = jax.nn.sigmoid(g[:, :H]); f_g = jax.nn.sigmoid(g[:, H:2 * H])
            g_g = jnp.tanh(g[:, 2 * H:3 * H]); o_g = jax.nn.sigmoid(g[:, 3 * H:])
            c_new = f_g * c[l] + i_g * g_g
            h_new = o_g * jnp.tanh(c_new)
            h[l] = m * h_new + (1.0 - m) * h[l]
            c[l] = m * c_new + (1.0 - m) * c[l]
            inp = h[l]
        outs.append(h[-1])
    hseq = jnp.stack(outs, axis=0)                                # (Tp, B, H)
    packed = hseq.reshape((T + 1) * B, H)[_packed_row_indices(lengths_np, B)]
    logits = packed @ params["lin_w"] + params["lin_b"]
    return logits, (jnp.stack(h), jnp.stack(c))


# ------------------------------------ main ---------------------------------------
if __name__ == "__main__":
    B, T, E, H, V, NUM_LAYERS = 6, 8, 64, 128, 256, 2
    Tp = T + 1
    lengths_np = np.array([9, 7, 6, 5, 3, 2], dtype=np.int32)   # includes the feature step

    key = jax.random.PRNGKey(0)
    ks = jax.random.split(key, 16)

    params = {
        "embed": jax.random.normal(ks[0], (V, E), jnp.float32) * 0.02,
        "ln_g": jnp.ones((E,), jnp.float32),
        "ln_b": jnp.zeros((E,), jnp.float32),
        "lin_w": jax.random.normal(ks[1], (H, V), jnp.float32) * 0.02,
        "lin_b": jax.random.normal(ks[2], (V,), jnp.float32) * 0.01,
        "lstm": [],
    }
    scale = 1.0 / np.sqrt(H)
    for layer in range(NUM_LAYERS):
        din = E if layer == 0 else H
        kk = jax.random.split(ks[3 + layer], 4)
        params["lstm"].append({
            "wih": jax.random.uniform(kk[0], (din, 4 * H), jnp.float32, -scale, scale),
            "whh": jax.random.uniform(kk[1], (H, 4 * H), jnp.float32, -scale, scale),
            "bias": jax.random.uniform(kk[2], (1, 4 * H), jnp.float32, -scale, scale),
        })

    features = jax.random.normal(ks[10], (B, E), jnp.float32)
    captions = jax.random.randint(ks[11], (B, T), 0, V, jnp.int32)
    prev_state = (jnp.zeros((NUM_LAYERS, B, H), jnp.float32),     # zero_state(B)
                  jnp.zeros((NUM_LAYERS, B, H), jnp.float32))

    prep = prepare_decoder_params(params)                         # one-time bf16/stacking
    logits, (h_n, c_n) = decoder_rnn_forward(prep, features, captions, lengths_np, prev_state)
    jax.block_until_ready((logits, h_n, c_n))

    N_packed = int(lengths_np.sum())
    assert logits.shape == (N_packed, V)
    assert h_n.shape == (NUM_LAYERS, B, H) and c_n.shape == (NUM_LAYERS, B, H)

    # correctness vs. pure-JAX f32 reference (bf16 operands + f32 accumulation in kernels)
    ref_logits, (ref_h, ref_c) = _reference_forward(params, features, captions,
                                                    lengths_np, prev_state)
    np.testing.assert_allclose(np.asarray(logits), np.asarray(ref_logits), rtol=2e-2, atol=2e-2)
    np.testing.assert_allclose(np.asarray(h_n), np.asarray(ref_h), rtol=2e-2, atol=2e-2)
    np.testing.assert_allclose(np.asarray(c_n), np.asarray(ref_c), rtol=2e-2, atol=2e-2)

    print("KERNEL_OK")
</pallas_src>

<mosaic_0001>
module attributes {stable_mosaic.version = 11 : i64} {
  func.func @_prep_kernel(%arg0: i32, %arg1: memref<1x8x64xf32, #tpu.memory_space<vmem>>, %arg2: memref<1x8x64xf32, #tpu.memory_space<vmem>>, %arg3: memref<1x64xf32, #tpu.memory_space<vmem>>, %arg4: memref<1x64xf32, #tpu.memory_space<vmem>>, %arg5: memref<64x512xbf16, #tpu.memory_space<vmem>>, %arg6: memref<1x512xf32, #tpu.memory_space<vmem>>, %arg7: memref<1x8x512xf32, #tpu.memory_space<vmem>>) attributes {dimension_semantics = [#tpu.dimension_semantics<parallel>], iteration_bounds = array<i64: 9>, scalar_prefetch = 0 : i64, scratch_operands = 0 : i64, tpu.core_type = #tpu.core_type<tc>, window_params = [{pipeline_mode = #tpu.pipeline_mode<synchronous>, transform_indices = @transform_0, window_bounds = array<i64: 1, 8, 64>}, {transform_indices = @transform_1, window_bounds = array<i64: 1, 8, 64>}, {pipeline_mode = #tpu.pipeline_mode<synchronous>, transform_indices = @transform_2, window_bounds = array<i64: 1, 64>}, {pipeline_mode = #tpu.pipeline_mode<synchronous>, transform_indices = @transform_3, window_bounds = array<i64: 1, 64>}, {pipeline_mode = #tpu.pipeline_mode<synchronous>, transform_indices = @transform_4, window_bounds = array<i64: 64, 512>}, {pipeline_mode = #tpu.pipeline_mode<synchronous>, transform_indices = @transform_5, window_bounds = array<i64: 1, 512>}, {transform_indices = @transform_6, window_bounds = array<i64: 1, 8, 512>}]} {
    %c0 = arith.constant 0 : index
    %c0_0 = arith.constant 0 : index
    %0 = vector.load %arg5[%c0, %c0_0] : memref<64x512xbf16, #tpu.memory_space<vmem>>, vector<64x512xbf16>
    %c0_1 = arith.constant 0 : index
    %c0_2 = arith.constant 0 : index
    %1 = vector.load %arg6[%c0_1, %c0_2] : memref<1x512xf32, #tpu.memory_space<vmem>>, vector<1x512xf32>
    %c0_i32 = arith.constant 0 : i32
    %2 = arith.cmpi eq, %arg0, %c0_i32 : i32
    %3 = arith.extui %2 : i1 to i32
    %c0_i32_3 = arith.constant 0 : i32
    %4 = arith.cmpi ne, %3, %c0_i32_3 : i32
    scf.if %4 {
      %c0_6 = arith.constant 0 : index
      %c0_7 = arith.constant 0 : index
      %c0_8 = arith.constant 0 : index
      %8 = vector.load %arg1[%c0_6, %c0_7, %c0_8] : memref<1x8x64xf32, #tpu.memory_space<vmem>>, vector<1x8x64xf32>
      %9 = vector.shape_cast %8 : vector<1x8x64xf32> to vector<8x64xf32>
      %10 = arith.truncf %9 : vector<8x64xf32> to vector<8x64xbf16>
      %cst = arith.constant dense<0.000000e+00> : vector<8x512xf32>
      %11 = tpu.matmul %10, %0, %cst {dimension_numbers = #tpu.dot_dimension_numbers<[1], [0], [0], [1], [0, 0, 1, 1], [], []>} : vector<8x64xbf16>, vector<64x512xbf16>, vector<8x512xf32> -> vector<8x512xf32>
      %12 = vector.broadcast %1 : vector<1x512xf32> to vector<8x512xf32>
      %13 = arith.addf %11, %12 : vector<8x512xf32>
      %c0_9 = arith.constant 0 : index
      %c0_10 = arith.constant 0 : index
      %c0_11 = arith.constant 0 : index
      %14 = vector.load %arg7[%c0_9, %c0_10, %c0_11] : memref<1x8x512xf32, #tpu.memory_space<vmem>>, vector<1x8x512xf32>
      %15 = vector.shape_cast %14 : vector<1x8x512xf32> to vector<8x512xf32>
      %16 = vector.shape_cast %13 : vector<8x512xf32> to vector<1x8x512xf32>
      tpu.vector_store %arg7[%c0_9, %c0_10, %c0_11], %16 {strides = array<i32>} : memref<1x8x512xf32, #tpu.memory_space<vmem>>, vector<1x8x512xf32>,
    } else {
    }
    %c0_i32_4 = arith.constant 0 : i32
    %5 = arith.cmpi ne, %arg0, %c0_i32_4 : i32
    %6 = arith.extui %5 : i1 to i32
    %c0_i32_5 = arith.constant 0 : i32
    %7 = arith.cmpi ne, %6, %c0_i32_5 : i32
    scf.if %7 {
      %c0_6 = arith.constant 0 : index
      %c0_7 = arith.constant 0 : index
      %c0_8 = arith.constant 0 : index
      %8 = vector.load %arg2[%c0_6, %c0_7, %c0_8] : memref<1x8x64xf32, #tpu.memory_space<vmem>>, vector<1x8x64xf32>
      %9 = vector.shape_cast %8 : vector<1x8x64xf32> to vector<8x64xf32>
      %cst = arith.constant dense<0.000000e+00> : vector<8xf32>
      %10 = vector.multi_reduction <add>, %9, %cst [1] : vector<8x64xf32> to vector<8xf32>
      %11 = vector.shape_cast %10 : vector<8xf32> to vector<8x1xf32>
      %cst_9 = arith.constant 6.400000e+01 : f32
      %12 = vector.broadcast %cst_9 : f32 to vector<8x1xf32>
      %13 = arith.divf %11, %12 : vector<8x1xf32>
      %14 = vector.broadcast %13 : vector<8x1xf32> to vector<8x64xf32>
      %15 = arith.subf %9, %14 : vector<8x64xf32>
      %16 = arith.mulf %15, %15 : vector<8x64xf32>
      %cst_10 = arith.constant dense<0.000000e+00> : vector<8xf32>
      %17 = vector.multi_reduction <add>, %16, %cst_10 [1] : vector<8x64xf32> to vector<8xf32>
      %18 = vector.shape_cast %17 : vector<8xf32> to vector<8x1xf32>
      %cst_11 = arith.constant 6.400000e+01 : f32
      %19 = vector.broadcast %cst_11 : f32 to vector<8x1xf32>
      %20 = arith.divf %18, %19 : vector<8x1xf32>
      %21 = vector.broadcast %13 : vector<8x1xf32> to vector<8x64xf32>
      %22 = arith.subf %9, %21 : vector<8x64xf32>
      %cst_12 = arith.constant 9.99999997E-7 : f32
      %23 = vector.broadcast %cst_12 : f32 to vector<8x1xf32>
      %24 = arith.addf %20, %23 : vector<8x1xf32>
      %25 = math.rsqrt %24 : vector<8x1xf32>
      %26 = vector.broadcast %25 : vector<8x1xf32> to vector<8x64xf32>
      %27 = arith.mulf %22, %26 : vector<8x64xf32>
      %c0_13 = arith.constant 0 : index
      %c0_14 = arith.constant 0 : index
      %28 = vector.load %arg3[%c0_13, %c0_14] : memref<1x64xf32, #tpu.memory_space<vmem>>, vector<1x64xf32>
      %29 = vector.broadcast %28 : vector<1x64xf32> to vector<8x64xf32>
      %30 = arith.mulf %27, %29 : vector<8x64xf32>
      %c0_15 = arith.constant 0 : index
      %c0_16 = arith.constant 0 : index
      %31 = vector.load %arg4[%c0_15, %c0_16] : memref<1x64xf32, #tpu.memory_space<vmem>>, vector<1x64xf32>
      %32 = vector.broadcast %31 : vector<1x64xf32> to vector<8x64xf32>
      %33 = arith.addf %30, %32 : vector<8x64xf32>
      %34 = arith.truncf %33 : vector<8x64xf32> to vector<8x64xbf16>
      %cst_17 = arith.constant dense<0.000000e+00> : vector<8x512xf32>
      %35 = tpu.matmul %34, %0, %cst_17 {dimension_numbers = #tpu.dot_dimension_numbers<[1], [0], [0], [1], [0, 0, 1, 1], [], []>} : vector<8x64xbf16>, vector<64x512xbf16>, vector<8x512xf32> -> vector<8x512xf32>
      %36 = vector.broadcast %1 : vector<1x512xf32> to vector<8x512xf32>
      %37 = arith.addf %35, %36 : vector<8x512xf32>
      %c0_18 = arith.constant 0 : index
      %c0_19 = arith.constant 0 : index
      %c0_20 = arith.constant 0 : index
      %38 = vector.load %arg7[%c0_18, %c0_19, %c0_20] : memref<1x8x512xf32, #tpu.memory_space<vmem>>, vector<1x8x512xf32>
      %39 = vector.shape_cast %38 : vector<1x8x512xf32> to vector<8x512xf32>
      %40 = vector.shape_cast %37 : vector<8x512xf32> to vector<1x8x512xf32>
      tpu.vector_store %arg7[%c0_18, %c0_19, %c0_20], %40 {strides = array<i32>} : memref<1x8x512xf32, #tpu.memory_space<vmem>>, vector<1x8x512xf32>,
    } else {
    }
    return
  }
  func.func @transform_0(%arg0: i32) -> (i32, i32, i32) {
    %c0_i32 = arith.constant 0 : i32
    %c0_i32_0 = arith.constant 0 : i32
    %c0_i32_1 = arith.constant 0 : i32
    %c0_i32_2 = arith.constant 0 : i32
    return %c0_i32, %c0_i32_0, %c0_i32_1 : i32, i32, i32
  }
  func.func @transform_1(%arg0: i32) -> (i32, i32, i32) {
    %c1_i32 = arith.constant 1 : i32
    %0 = arith.subi %arg0, %c1_i32 : i32
    %c0_i32 = arith.constant 0 : i32
    %1 = arith.maxsi %0, %c0_i32 : i32
    %c0_i32_0 = arith.constant 0 : i32
    %c0_i32_1 = arith.constant 0 : i32
    %c0_i32_2 = arith.constant 0 : i32
    return %1, %c0_i32_0, %c0_i32_1 : i32, i32, i32
  }
  func.func @transform_2(%arg0: i32) -> (i32, i32) {
    %c0_i32 = arith.constant 0 : i32
    %c0_i32_0 = arith.constant 0 : i32
    %c0_i32_1 = arith.constant 0 : i32
    return %c0_i32, %c0_i32_0 : i32, i32
  }
  func.func @transform_3(%arg0: i32) -> (i32, i32) {
    %c0_i32 = arith.constant 0 : i32
    %c0_i32_0 = arith.constant 0 : i32
    %c0_i32_1 = arith.constant 0 : i32
    return %c0_i32, %c0_i32_0 : i32, i32
  }
  func.func @transform_4(%arg0: i32) -> (i32, i32) {
    %c0_i32 = arith.constant 0 : i32
    %c0_i32_0 = arith.constant 0 : i32
    %c0_i32_1 = arith.constant 0 : i32
    return %c0_i32, %c0_i32_0 : i32, i32
  }
  func.func @transform_5(%arg0: i32) -> (i32, i32) {
    %c0_i32 = arith.constant 0 : i32
    %c0_i32_0 = arith.constant 0 : i32
    %c0_i32_1 = arith.constant 0 : i32
    return %c0_i32, %c0_i32_0 : i32, i32
  }
  func.func @transform_6(%arg0: i32) -> (i32, i32, i32) {
    %c0_i32 = arith.constant 0 : i32
    %c0_i32_0 = arith.constant 0 : i32
    %c0_i32_1 = arith.constant 0 : i32
    return %arg0, %c0_i32, %c0_i32_0 : i32, i32, i32
  }
}

</mosaic_0001>

<llo_original>
// kernel: tpu_custom_call.1
$region0: #{tpu_custom_call.1}
  #allocation0 [shape = 'u32[]', space=smem, size = 0x4, offset = 0x4, fixed_abs, tag = 'smem constant byte address 0x4 - core index']
  #allocation1 [shape = 'u32[144,128]{1,0:T(1,128)}', space=vmem, size = 0x12000, scoped, tag = 'internal scratch']
  %s0 = inlined_call_operand.hbm [shape: f32[1,8,64], index: 0, kind: input, shape index: {}]
  %s1 = inlined_call_operand.hbm [shape: f32[8,8,64], index: 1, kind: input, shape index: {}]
  %s2 = inlined_call_operand.vmem [shape: f32[1,64], index: 2, kind: input, shape index: {}]
  %s3 = inlined_call_operand.vmem [shape: f32[1,64], index: 3, kind: input, shape index: {}]
  %s4 = inlined_call_operand.hbm [shape: bf16[64,512], index: 4, kind: input, shape index: {}]
  %s5 = inlined_call_operand.vmem [shape: f32[1,512], index: 5, kind: input, shape index: {}]
  %s6 = inlined_call_operand.hbm [shape: f32[9,8,512], index: 6, kind: output, shape index: {}]
  %s7 = sld [smem:[#allocation0]]
  $region77: #{tpu_custom_call.1} parent=0
    _
  %s9 = ssub.s32 1, %s7
  %s10 = scalar_select 0, %s9, %s7
  $region1: #{tpu_custom_call.1} parent=0
    #allocation2 [shape = 'u8[4096]{0}', space=vmem, size = 0x1000, scoped, tag = 'input window, operand 0, single buffered']
    #allocation3 [shape = 's32[2]{0}', space=sflag, size = 0x8, scoped, tag = 'scoped memory for tpu_custom_call.1']
    #allocation4 [shape = 's32[2]{0}', space=sflag, size = 0x8, scoped, tag = 'scoped memory for tpu_custom_call.1']
    #allocation5 [shape = 'u8[8192]{0}', space=vmem, size = 0x2000, scoped, tag = 'input window, operand 1']
    #allocation6 [shape = 's32[2]{0}', space=sflag, size = 0x8, scoped, tag = 'scoped memory for tpu_custom_call.1']
    #allocation7 [shape = 'u8[65536]{0}', space=vmem, size = 0x10000, scoped, tag = 'input window, operand 4, single buffered']
    #allocation8 [shape = 'u8[32768]{0}', space=vmem, size = 0x8000, scoped, tag = 'output window, operand 0']
    %11 = vsyncpa [#allocation3], 0
    %12 = vsyncpa [#allocation6], 0
    %s13 = scalar_lea.sflag [#allocation6], 1
    %14 = vsyncpa %s13, 0
    %15 = vsyncpa [#allocation4], 0
    %s16 = scalar_lea.sflag [#allocation4], 1
    %17 = vsyncpa %s16, 0
    loop: start=0, step=1, limit=11
    $region2: #{tpu_custom_call.1} parent=1 // loop_pre_header
      _
    $region3: #{tpu_custom_call.1} parent=1 // loop_header
      %s19 = sphi 0, %s23
      %p20 = scmp.ge.s32.totalorder %s19, 11
      %s27 = sphi 0, %s27
      %s29 = sphi 0, %s27
      %s30 = sphi 0, %s29
      %s44 = sphi 0, %s30
      %s56 = sphi 0, %s58
      %s59 = sphi 0, %s56
      %s60 = sphi 0, %s59
      %s76 = sphi 0, %s60
      %s80 = sphi 0, %s80
      %s82 = sphi 0, %s80
      %s83 = sphi 0, %s82
      %s97 = sphi 0, %s83
      %s101 = sphi 0, %s101
      %s103 = sphi 0, %s101
      %s104 = sphi 0, %s103
      %s118 = sphi 0, %s104
      %s122 = sphi 0, %s122
      %s124 = sphi 0, %s122
      %s125 = sphi 0, %s124
      %s139 = sphi 0, %s125
      %s143 = sphi 0, %s143
      %s145 = sphi 0, %s143
      %s146 = sphi 0, %s145
      %s160 = sphi 0, %s146
      %s166 = sphi 0, %s168
      %s169 = sphi 0, %s166
      %s170 = sphi 0, %s169
      %s186 = sphi 0, %s170
    $region4: #{tpu_custom_call.1} parent=1 // loop_header_branch
      %22 = sbr.rel (%p20) target = $region8
    $region5: #{tpu_custom_call.1} parent=1 // loop_body
      %s24 = ssub.s32 %s19, 1
      %s25 = ssub.s32 %s19, 2
      %s26 = sadd.s32 %s19, 1
      %s28 = sadd.s32 %s27, 1
      %p31 = scmp.eq.s32.totalorder %s19, 8
      %p32 = scmp.ne.s32.totalorder %s27, %s29
      %p33 = scmp.eq.s32.totalorder %s19, 0
      %p34 = por %p32, %p33
      %p35 = scmp.ne.s32.totalorder %s27, %s29
      %p36 = scmp.eq.s32.totalorder %s24, 8
      %p37 = por %p35, %p36
      %p38 = scmp.ne.s32.totalorder %s29, %s30
      %p39 = scmp.eq.s32.totalorder %s24, 0
      %p40 = por %p38, %p39
      %p41 = scmp.ne.s32.totalorder %s29, %s30
      %p42 = scmp.eq.s32.totalorder %s25, 8
      %p43 = por %p41, %p42
      %p45 = scmp.ne.s32.totalorder %s30, %s44
      %p46 = scmp.eq.s32.totalorder %s25, 0
      %p47 = por %p45, %p46
      %s48 = ssub.s32 %s19, 1
      %p49 = scmp.gt.s32.totalorder %s48, 0
      %s50 = scalar_select %p49, %s48, 0
      %s51 = ssub.s32 %s26, 1
      %p52 = scmp.gt.s32.totalorder %s51, 0
      %s53 = scalar_select %p52, %s51, 0
      %s54 = ssub.s32 %s50, %s53
      %p55 = scmp.eq.s32.totalorder %s54, 0
      %s57 = sadd.s32 %s56, 1
      %s58 = scalar_select %p55, %s56, %s57
      %p61 = pneg %p55
      %p62 = scmp.eq.s32.totalorder %s19, 8
      %p63 = por %p61, %p62
      %p64 = scmp.ne.s32.totalorder %s56, %s59
      %p65 = scmp.eq.s32.totalorder %s19, 0
      %p66 = por %p64, %p65
      %p67 = scmp.ne.s32.totalorder %s56, %s59
      %p68 = scmp.eq.s32.totalorder %s24, 8
      %p69 = por %p67, %p68
      %p70 = scmp.ne.s32.totalorder %s59, %s60
      %p71 = scmp.eq.s32.totalorder %s24, 0
      %p72 = por %p70, %p71
      %p73 = scmp.ne.s32.totalorder %s59, %s60
      %p74 = scmp.eq.s32.totalorder %s25, 8
      %p75 = por %p73, %p74
      %p77 = scmp.ne.s32.totalorder %s60, %s76
      %p78 = scmp.eq.s32.totalorder %s25, 0
      %p79 = por %p77, %p78
      %s81 = sadd.s32 %s80, 1
      %p84 = scmp.eq.s32.totalorder %s19, 8
      %p85 = scmp.ne.s32.totalorder %s80, %s82
      %p86 = scmp.eq.s32.totalorder %s19, 0
      %p87 = por %p85, %p86
      %p88 = scmp.ne.s32.totalorder %s80, %s82
      %p89 = scmp.eq.s32.totalorder %s24, 8
      %p90 = por %p88, %p89
      %p91 = scmp.ne.s32.totalorder %s82, %s83
      %p92 = scmp.eq.s32.totalorder %s24, 0
      %p93 = por %p91, %p92
      %p94 = scmp.ne.s32.totalorder %s82, %s83
      %p95 = scmp.eq.s32.totalorder %s25, 8
      %p96 = por %p94, %p95
      %p98 = scmp.ne.s32.totalorder %s83, %s97
      %p99 = scmp.eq.s32.totalorder %s25, 0
      %p100 = por %p98, %p99
      %s102 = sadd.s32 %s101, 1
      %p105 = scmp.eq.s32.totalorder %s19, 8
      %p106 = scmp.ne.s32.totalorder %s101, %s103
      %p107 = scmp.eq.s32.totalorder %s19, 0
      %p108 = por %p106, %p107
      %p109 = scmp.ne.s32.totalorder %s101, %s103
      %p110 = scmp.eq.s32.totalorder %s24, 8
      %p111 = por %p109, %p110
      %p112 = scmp.ne.s32.totalorder %s103, %s104
      %p113 = scmp.eq.s32.totalorder %s24, 0
      %p114 = por %p112, %p113
      %p115 = scmp.ne.s32.totalorder %s103, %s104
      %p116 = scmp.eq.s32.totalorder %s25, 8
      %p117 = por %p115, %p116
      %p119 = scmp.ne.s32.totalorder %s104, %s118
      %p120 = scmp.eq.s32.totalorder %s25, 0
      %p121 = por %p119, %p120
      %s123 = sadd.s32 %s122, 1
      %p126 = scmp.eq.s32.totalorder %s19, 8
      %p127 = scmp.ne.s32.totalorder %s122, %s124
      %p128 = scmp.eq.s32.totalorder %s19, 0
      %p129 = por %p127, %p128
      %p130 = scmp.ne.s32.totalorder %s122, %s124
      %p131 = scmp.eq.s32.totalorder %s24, 8
      %p132 = por %p130, %p131
      %p133 = scmp.ne.s32.totalorder %s124, %s125
      %p134 = scmp.eq.s32.totalorder %s24, 0
      %p135 = por %p133, %p134
      %p136 = scmp.ne.s32.totalorder %s124, %s125
      %p137 = scmp.eq.s32.totalorder %s25, 8
      %p138 = por %p136, %p137
      %p140 = scmp.ne.s32.totalorder %s125, %s139
      %p141 = scmp.eq.s32.totalorder %s25, 0
      %p142 = por %p140, %p141
      %s144 = sadd.s32 %s143, 1
      %p147 = scmp.eq.s32.totalorder %s19, 8
      %p148 = scmp.ne.s32.totalorder %s143, %s145
      %p149 = scmp.eq.s32.totalorder %s19, 0
      %p150 = por %p148, %p149
      %p151 = scmp.ne.s32.totalorder %s143, %s145
      %p152 = scmp.eq.s32.totalorder %s24, 8
      %p153 = por %p151, %p152
      %p154 = scmp.ne.s32.totalorder %s145, %s146
      %p155 = scmp.eq.s32.totalorder %s24, 0
      %p156 = por %p154, %p155
      %p157 = scmp.ne.s32.totalorder %s145, %s146
      %p158 = scmp.eq.s32.totalorder %s25, 8
      %p159 = por %p157, %p158
      %p161 = scmp.ne.s32.totalorder %s146, %s160
      %p162 = scmp.eq.s32.totalorder %s25, 0
      %p163 = por %p161, %p162
      %s164 = ssub.s32 %s19, %s26
      %p165 = scmp.eq.s32.totalorder %s164, 0
      %s167 = sadd.s32 %s166, 1
      %s168 = scalar_select %p165, %s166, %s167
      %p171 = pneg %p165
      %p172 = scmp.eq.s32.totalorder %s19, 8
      %p173 = por %p171, %p172
      %p174 = scmp.ne.s32.totalorder %s166, %s169
      %p175 = scmp.eq.s32.totalorder %s19, 0
      %p176 = por %p174, %p175
      %p177 = scmp.ne.s32.totalorder %s166, %s169
      %p178 = scmp.eq.s32.totalorder %s24, 8
      %p179 = por %p177, %p178
      %p180 = scmp.ne.s32.totalorder %s169, %s170
      %p181 = scmp.eq.s32.totalorder %s24, 0
      %p182 = por %p180, %p181
      %p183 = scmp.ne.s32.totalorder %s169, %s170
      %p184 = scmp.eq.s32.totalorder %s25, 8
      %p185 = por %p183, %p184
      %p187 = scmp.ne.s32.totalorder %s170, %s186
      %p188 = scmp.eq.s32.totalorder %s25, 0
      %p189 = por %p187, %p188
      %p190 = scmp.le.s32.totalorder 1, %s19
      %p191 = scmp.lt.s32.totalorder %s19, 10
      %p192 = pnand %p190, %p191
      %p193 = pneg %p192
      // Predicated region
      $region9: #{tpu_custom_call.1} parent=5 // pred_check
        _
      $region10: #{tpu_custom_call.1} parent=5 // pred_check_branch
        %195 = sbr.rel (%p192) target = $region12
      $region11: #{tpu_custom_call.1} parent=5 // pred_region
        %s196 = ssub.s32 %s19, 1
        // Predicated region
        $region13: #{tpu_custom_call.1} parent=11 // pred_check
          %p197 = pneg %p40
        $region14: #{tpu_custom_call.1} parent=11 // pred_check_branch
          %199 = sbr.rel (%p197) target = $region16
        $region15: #{tpu_custom_call.1} parent=11 // pred_region
          %s201 = ssub.s32 128, 128
          %202 = vsyncadd [#allocation3], %s201
          %s204 = sshll.u32 [#allocation2], 4
          %s205 = int_to_ptr.vmem [resolvable:$true] %s204
          %207 = dma.hbm_to_vmem [thread:$0]  %s0, 128, %s205, [#allocation3]
        $region16: #{tpu_custom_call.1} parent=11 // pred_fallthru
          _
        // Predicated region
        $region17: #{tpu_custom_call.1} parent=11 // pred_check
          %p208 = pneg %p93
        $region18: #{tpu_custom_call.1} parent=11 // pred_check_branch
          %210 = sbr.rel (%p208) target = $region20
        $region19: #{tpu_custom_call.1} parent=11 // pred_region
          _
        $region20: #{tpu_custom_call.1} parent=11 // pred_fallthru
          _
        // Predicated region
        $region21: #{tpu_custom_call.1} parent=11 // pred_check
          %p211 = pneg %p114
        $region22: #{tpu_custom_call.1} parent=11 // pred_check_branch
          %213 = sbr.rel (%p211) target = $region24
        $region23: #{tpu_custom_call.1} parent=11 // pred_region
          _
        $region24: #{tpu_custom_call.1} parent=11 // pred_fallthru
          _
        // Predicated region
        $region25: #{tpu_custom_call.1} parent=11 // pred_check
          %p214 = pneg %p135
        $region26: #{tpu_custom_call.1} parent=11 // pred_check_branch
          %216 = sbr.rel (%p214) target = $region28
        $region27: #{tpu_custom_call.1} parent=11 // pred_region
          %s218 = ssub.s32 2048, 2048
          %219 = vsyncadd [#allocation6], %s218
          %s220 = sshll.u32 [#allocation7], 4
          %s221 = int_to_ptr.vmem [resolvable:$true] %s220
          %226 = dma.hbm_to_vmem [thread:$0]  %s4, 2048, %s221, [#allocation6], 256, 256, 16
        $region28: #{tpu_custom_call.1} parent=11 // pred_fallthru
          _
        // Predicated region
        $region29: #{tpu_custom_call.1} parent=11 // pred_check
          %p227 = pneg %p156
        $region30: #{tpu_custom_call.1} parent=11 // pred_check_branch
          %229 = sbr.rel (%p227) target = $region32
        $region31: #{tpu_custom_call.1} parent=11 // pred_region
          _
        $region32: #{tpu_custom_call.1} parent=11 // pred_fallthru
          _
      $region12: #{tpu_custom_call.1} parent=5 // pred_fallthru
        _
      %p230 = scmp.lt.s32.totalorder %s19, 9
      // Predicated region
      $region33: #{tpu_custom_call.1} parent=5 // pred_check
        %p231 = pneg %p230
      $region34: #{tpu_custom_call.1} parent=5 // pred_check_branch
        %233 = sbr.rel (%p231) target = $region36
      $region35: #{tpu_custom_call.1} parent=5 // pred_region
        // Predicated region
        $region37: #{tpu_custom_call.1} parent=35 // pred_check
          %p234 = pneg %p66
        $region38: #{tpu_custom_call.1} parent=35 // pred_check_branch
          %236 = sbr.rel (%p234) target = $region40
        $region39: #{tpu_custom_call.1} parent=35 // pred_region
          %s237 = sand.u32 %s19, 1
          %s238 = scalar_lea.sflag [#allocation6], %s237
          %s239 = sand.u32 %s56, 1
          %s240 = smul.addr %s239, 8
          %s241 = scalar_lea.vmem [#allocation5], %s240
          %s242 = ssub.s32 %s19, 1
          %p243 = scmp.gt.s32.totalorder %s242, 0
          %s244 = scalar_select %p243, %s242, 0
          %s246 = ssub.s32 128, 128
          %247 = vsyncadd %s238, %s246
          %s248 = smul.addr %s244, 128
          %s249 = scalar_lea.hbm %s1, %s248
          %s251 = sshll.u32 %s241, 4
          %s252 = int_to_ptr.vmem [resolvable:$true] %s251
          %254 = dma.hbm_to_vmem [thread:$0]  %s249, 128, %s252, %s238
        $region40: #{tpu_custom_call.1} parent=35 // pred_fallthru
          _
      $region36: #{tpu_custom_call.1} parent=5 // pred_fallthru
        _
      %p255 = scmp.le.s32.totalorder 1, %s19
      %p256 = scmp.lt.s32.totalorder %s19, 10
      %p257 = pnand %p255, %p256
      %p258 = pneg %p257
      // Predicated region
      $region41: #{tpu_custom_call.1} parent=5 // pred_check
        _
      $region42: #{tpu_custom_call.1} parent=5 // pred_check_branch
        %260 = sbr.rel (%p257) target = $region44
      $region43: #{tpu_custom_call.1} parent=5 // pred_region
        %s261 = ssub.s32 %s19, 1
        // Predicated region
        $region45: #{tpu_custom_call.1} parent=43 // pred_check
          %p262 = pneg %p40
        $region46: #{tpu_custom_call.1} parent=43 // pred_check_branch
          %264 = sbr.rel (%p262) target = $region48
        $region47: #{tpu_custom_call.1} parent=43 // pred_region
          %265 = dma.done [#allocation3], 128
        $region48: #{tpu_custom_call.1} parent=43 // pred_fallthru
          _
        %s266 = sand.u32 %s24, 1
        %s267 = scalar_lea.sflag [#allocation6], %s266
        %s268 = sand.u32 %s59, 1
        %s269 = smul.addr %s268, 8
        %s270 = scalar_lea.vmem [#allocation5], %s269
        // Predicated region
        $region49: #{tpu_custom_call.1} parent=43 // pred_check
          %p271 = pneg %p72
        $region50: #{tpu_custom_call.1} parent=43 // pred_check_branch
          %273 = sbr.rel (%p271) target = $region52
        $region51: #{tpu_custom_call.1} parent=43 // pred_region
          %274 = dma.done %s267, 128
        $region52: #{tpu_custom_call.1} parent=43 // pred_fallthru
          _
        // Predicated region
        $region53: #{tpu_custom_call.1} parent=43 // pred_check
          %p275 = pneg %p135
        $region54: #{tpu_custom_call.1} parent=43 // pred_check_branch
          %277 = sbr.rel (%p275) target = $region56
        $region55: #{tpu_custom_call.1} parent=43 // pred_region
          %278 = dma.done [#allocation6], 2048
        $region56: #{tpu_custom_call.1} parent=43 // pred_fallthru
          _
        %p279 = pneg %p40
        %p280 = pneg %p37
        %s281 = sand.u32 %s24, 1
        %s282 = scalar_lea.sflag [#allocation6], %s281
        %s283 = sand.u32 %s59, 1
        %s284 = smul.addr %s283, 8
        %s285 = scalar_lea.vmem [#allocation5], %s284
        %p286 = pneg %p72
        %p287 = pneg %p69
        %p288 = pneg %p93
        %p289 = pneg %p90
        %p290 = pneg %p114
        %p291 = pneg %p111
        %p292 = pneg %p135
        %p293 = pneg %p132
        %p294 = pneg %p156
        %p295 = pneg %p153
        %p296 = pneg %p182
        %p297 = pneg %p179
        %s298 = sand.u32 %s169, 1
        %s299 = scalar_lea.sflag [#allocation4], %s298
        %s300 = sand.u32 %s169, 1
        %s301 = smul.addr %s300, 32
        %s302 = scalar_lea.vmem [#allocation8], %s301
        %s303 = ssub.s32 %s24, 1
        %p304 = scmp.gt.s32.totalorder %s303, 0
        %s305 = scalar_select %p304, %s303, 0
        %v307 = vld [vmem:[#allocation7] sm:$0xff]
        %v308 = vld [vmem:[#allocation7 + $0x8] sm:$0xff]
        %v309 = vld [vmem:[#allocation7 + $0x10] sm:$0xff]
        %v310 = vld [vmem:[#allocation7 + $0x18] sm:$0xff]
        %v311 = vld [vmem:[#allocation7 + $0x20] sm:$0xff]
        %v312 = vld [vmem:[#allocation7 + $0x28] sm:$0xff]
        %v313 = vld [vmem:[#allocation7 + $0x30] sm:$0xff]
        %v314 = vld [vmem:[#allocation7 + $0x38] sm:$0xff]
        %v315 = vld [vmem:[#allocation7 + $0x40] sm:$0xff]
        %v316 = vld [vmem:[#allocation7 + $0x48] sm:$0xff]
        %v317 = vld [vmem:[#allocation7 + $0x50] sm:$0xff]
        %v318 = vld [vmem:[#allocation7 + $0x58] sm:$0xff]
        %v319 = vld [vmem:[#allocation7 + $0x60] sm:$0xff]
        %v320 = vld [vmem:[#allocation7 + $0x68] sm:$0xff]
        %v321 = vld [vmem:[#allocation7 + $0x70] sm:$0xff]
        %v322 = vld [vmem:[#allocation7 + $0x78] sm:$0xff]
        %v323 = vld [vmem:[%s5] sm:$0xf]
        %p324 = scmp.eq.s32.totalorder %s24, 0
        // Predicated region
        $region57: #{tpu_custom_call.1} parent=43 // pred_check
          %p325 = pneg %p324
        $region58: #{tpu_custom_call.1} parent=43 // pred_check_branch
          %327 = sbr.rel (%p325) target = $region60
        $region59: #{tpu_custom_call.1} parent=43 // pred_region
          %v328 = vld [vmem:[#allocation2] sm:$0xff]
          %v329 = vpack.c.bf16 %v328, %v328
          %v331 = vlaneseq
          %v332 = vshrl.u32 %v331, 7
          %v333 = vsub.s32 0, %v332
          %v334 = vrot.slane %v323, %v333
          %v335 = vlaneseq
          %v336 = vshrl.u32 %v335, 7
          %v337 = vsub.s32 1, %v336
          %v338 = vrot.slane %v323, %v337
          %v339 = vlaneseq
          %v340 = vshrl.u32 %v339, 7
          %v341 = vsub.s32 2, %v340
          %v342 = vrot.slane %v323, %v341
          %v343 = vlaneseq
          %v344 = vshrl.u32 %v343, 7
          %v345 = vsub.s32 3, %v344
          %v346 = vrot.slane %v323, %v345
          %v367 = vunpack.c.l.b16 %v307
          %v368 = vunpack.c.h.b16 %v307
          %v369 = vunpack.c.l.b16 %v308
          %v370 = vunpack.c.h.b16 %v308
          %v371 = vunpack.c.l.b16 %v309
          %v372 = vunpack.c.h.b16 %v309
          %v373 = vunpack.c.l.b16 %v310
          %v374 = vunpack.c.h.b16 %v310
          %v375 = vunpack.c.l.b16 %v311
          %v376 = vunpack.c.h.b16 %v311
          %v377 = vunpack.c.l.b16 %v312
          %v378 = vunpack.c.h.b16 %v312
          %v379 = vunpack.c.l.b16 %v313
          %v380 = vunpack.c.h.b16 %v313
          %v381 = vunpack.c.l.b16 %v314
          %v382 = vunpack.c.h.b16 %v314
          %v383 = vunpack.c.l.b16 %v315
          %v384 = vunpack.c.h.b16 %v315
          %v385 = vunpack.c.l.b16 %v316
          %v386 = vunpack.c.h.b16 %v316
          %v387 = vunpack.c.l.b16 %v317
          %v388 = vunpack.c.h.b16 %v317
          %v389 = vunpack.c.l.b16 %v318
          %v390 = vunpack.c.h.b16 %v318
          %v391 = vunpack.c.l.b16 %v319
          %v392 = vunpack.c.h.b16 %v319
          %v393 = vunpack.c.l.b16 %v320
          %v394 = vunpack.c.h.b16 %v320
          %v395 = vunpack.c.l.b16 %v321
          %v396 = vunpack.c.h.b16 %v321
          %v397 = vunpack.c.l.b16 %v322
          %v398 = vunpack.c.h.b16 %v322
          %v399 = vpack.c.b16 %v371, %v367
          %v400 = vpack.c.b16 %v372, %v368
          %v401 = vpack.c.b16 %v373, %v369
          %v402 = vpack.c.b16 %v374, %v370
          %v403 = vpack.c.b16 %v379, %v375
          %v404 = vpack.c.b16 %v380, %v376
          %v405 = vpack.c.b16 %v381, %v377
          %v406 = vpack.c.b16 %v382, %v378
          %v407 = vpack.c.b16 %v387, %v383
          %v408 = vpack.c.b16 %v388, %v384
          %v409 = vpack.c.b16 %v389, %v385
          %v410 = vpack.c.b16 %v390, %v386
          %v411 = vpack.c.b16 %v395, %v391
          %v412 = vpack.c.b16 %v396, %v392
          %v413 = vpack.c.b16 %v397, %v393
          %v414 = vpack.c.b16 %v398, %v394
          %vm431 = vcmask 523264
          %v433 = vsel %vm431, %v329, 0
          %435 = vmatprep.subr.bf16.mxu0 %v400
          %436 = vmatpush1.bf16.msra.mxu0 %v399
          %437 = vmatprep.subr.bf16.mxu0 %v404
          %438 = vmatpush1.bf16.msra.mxu0 %v403
          %439 = vmatprep.subr.bf16.mxu0 %v408
          %440 = vmatpush1.bf16.msra.mxu0 %v407
          %441 = vmatprep.subr.bf16.mxu0 %v412
          %442 = vmatpush1.bf16.msra.mxu0 %v411
          %443 = vmatprep.subr.bf16.mxu0 0
          %444 = vmatpush1.bf16.msra.mxu0 0
          %445 = vmatprep.subr.bf16.mxu0 0
          %446 = vmatpush1.bf16.msra.mxu0 0
          %447 = vmatprep.subr.bf16.mxu0 0
          %448 = vmatpush1.bf16.msra.mxu0 0
          %449 = vmatprep.subr.bf16.mxu0 0
          %450 = vmatpush1.bf16.msra.mxu0 0
          %451 = vmatprep.subr.bf16.mxu0 0
          %452 = vmatpush1.bf16.msra.mxu0 0
          %453 = vmatprep.subr.bf16.mxu0 0
          %454 = vmatpush1.bf16.msra.mxu0 0
          %455 = vmatprep.subr.bf16.mxu0 0
          %456 = vmatpush1.bf16.msra.mxu0 0
          %457 = vmatprep.subr.bf16.mxu0 0
          %458 = vmatpush1.bf16.msra.mxu0 0
          %459 = vmatprep.subr.bf16.mxu0 0
          %460 = vmatpush1.bf16.msra.mxu0 0
          %461 = vmatprep.subr.bf16.mxu0 0
          %462 = vmatpush1.bf16.msra.mxu0 0
          %463 = vmatprep.subr.bf16.mxu0 0
          %464 = vmatpush1.bf16.msra.mxu0 0
          %465 = vmatprep.subr.bf16.mxu0 0
          %466 = vmatpush1.bf16.msra.mxu0 0
          %467 = vmatprep.mubr.bf16.mxu0 0
          %468 = vmatmul.mubr.bf16.gmra.mrb[0].mxu0 %v433
          %v469 = vpop.f32.mrb[0].mxu0
          %v470 = vadd.f32 %v334, %v469
          %v471 = vpop.f32.mrb[0].mxu0
          %v472 = vadd.f32 %v338, %v471
          %v473 = vpop.f32.mrb[0].mxu0
          %v474 = vpop.f32.mrb[0].mxu0
          %475 = vdwg.mxu0
          %476 = vmatprep.subr.bf16.mxu0 %v402
          %477 = vmatpush1.bf16.msra.mxu0 %v401
          %478 = vmatprep.subr.bf16.mxu0 %v406
          %479 = vmatpush1.bf16.msra.mxu0 %v405
          %480 = vmatprep.subr.bf16.mxu0 %v410
          %481 = vmatpush1.bf16.msra.mxu0 %v409
          %482 = vmatprep.subr.bf16.mxu0 %v414
          %483 = vmatpush1.bf16.msra.mxu0 %v413
          %484 = vmatprep.subr.bf16.mxu0 0
          %485 = vmatpush1.bf16.msra.mxu0 0
          %486 = vmatprep.subr.bf16.mxu0 0
          %487 = vmatpush1.bf16.msra.mxu0 0
          %488 = vmatprep.subr.bf16.mxu0 0
          %489 = vmatpush1.bf16.msra.mxu0 0
          %490 = vmatprep.subr.bf16.mxu0 0
          %491 = vmatpush1.bf16.msra.mxu0 0
          %492 = vmatprep.subr.bf16.mxu0 0
          %493 = vmatpush1.bf16.msra.mxu0 0
          %494 = vmatprep.subr.bf16.mxu0 0
          %495 = vmatpush1.bf16.msra.mxu0 0
          %496 = vmatprep.subr.bf16.mxu0 0
          %497 = vmatpush1.bf16.msra.mxu0 0
          %498 = vmatprep.subr.bf16.mxu0 0
          %499 = vmatpush1.bf16.msra.mxu0 0
          %500 = vmatprep.subr.bf16.mxu0 0
          %501 = vmatpush1.bf16.msra.mxu0 0
          %502 = vmatprep.subr.bf16.mxu0 0
          %503 = vmatpush1.bf16.msra.mxu0 0
          %504 = vmatprep.subr.bf16.mxu0 0
          %505 = vmatpush1.bf16.msra.mxu0 0
          %506 = vmatprep.subr.bf16.mxu0 0
          %507 = vmatpush1.bf16.msra.mxu0 0
          %508 = vmatprep.mubr.bf16.mxu0 0
          %509 = vmatmul.mubr.bf16.gmra.mrb[0].mxu0 %v433
          %v510 = vpop.f32.mrb[0].mxu0
          %v511 = vadd.f32 %v342, %v510
          %v512 = vpop.f32.mrb[0].mxu0
          %v513 = vadd.f32 %v346, %v512
          %v514 = vpop.f32.mrb[0].mxu0
          %v515 = vpop.f32.mrb[0].mxu0
          %516 = vdwg.mxu0
          %517 = vst [vmem:[%s302] sm:$0xff] %v470
          %518 = vst [vmem:[%s302 + $0x8] sm:$0xff] %v472
          %519 = vst [vmem:[%s302 + $0x10] sm:$0xff] %v511
          %520 = vst [vmem:[%s302 + $0x18] sm:$0xff] %v513
        $region60: #{tpu_custom_call.1} parent=43 // pred_fallthru
          _
        %p521 = scmp.ne.s32.totalorder %s24, 0
        // Predicated region
        $region61: #{tpu_custom_call.1} parent=43 // pred_check
          %p522 = pneg %p521
        $region62: #{tpu_custom_call.1} parent=43 // pred_check_branch
          %524 = sbr.rel (%p522) target = $region64
        $region63: #{tpu_custom_call.1} parent=43 // pred_region
          %v525 = vld [vmem:[%s270] sm:$0xff]
          %vm526 = vcmask 523264
          %v527 = vsel %vm526, %v525, 0.0
          %528 = vadd.xlane.f32.xlu0 %v527
          %v529 = vpop.xlane.xlu0 %528
          %v530 = vrcp.pop 64.0
          %v531 = vmul.f32 %v529, %v530
          %v532 = vsub.f32 %v525, %v531
          %v533 = vmul.f32 %v532, %v532
          %v534 = vsel %vm526, %v533, 0.0
          %535 = vadd.xlane.f32.xlu0 %v534
          %v536 = vpop.xlane.xlu0 %535
          %v537 = vmul.f32 %v536, %v530
          %v538 = vadd.f32 %v537, 1e-06
          %v539 = vrsqrt.pop %v538
          %v540 = vmul.f32 %v532, %v539
          %v541 = vld [vmem:[%s2] sm:$0x1]
          %v543 = vlaneseq
          %v544 = vshrl.u32 %v543, 7
          %v545 = vsub.s32 0, %v544
          %v546 = vrot.slane %v541, %v545
          %v548 = vmul.f32 %v540, %v546
          %v549 = vld [vmem:[%s3] sm:$0x1]
          %v551 = vlaneseq
          %v552 = vshrl.u32 %v551, 7
          %v553 = vsub.s32 0, %v552
          %v554 = vrot.slane %v549, %v553
          %v556 = vadd.f32 %v548, %v554
          %v557 = vpack.c.bf16 %v556, %v556
          %v559 = vlaneseq
          %v560 = vshrl.u32 %v559, 7
          %v561 = vsub.s32 0, %v560
          %v562 = vrot.slane %v323, %v561
          %v563 = vlaneseq
          %v564 = vshrl.u32 %v563, 7
          %v565 = vsub.s32 1, %v564
          %v566 = vrot.slane %v323, %v565
          %v567 = vlaneseq
          %v568 = vshrl.u32 %v567, 7
          %v569 = vsub.s32 2, %v568
          %v570 = vrot.slane %v323, %v569
          %v571 = vlaneseq
          %v572 = vshrl.u32 %v571, 7
          %v573 = vsub.s32 3, %v572
          %v574 = vrot.slane %v323, %v573
          %v595 = vunpack.c.l.b16 %v307
          %v596 = vunpack.c.h.b16 %v307
          %v597 = vunpack.c.l.b16 %v308
          %v598 = vunpack.c.h.b16 %v308
          %v599 = vunpack.c.l.b16 %v309
          %v600 = vunpack.c.h.b16 %v309
          %v601 = vunpack.c.l.b16 %v310
          %v602 = vunpack.c.h.b16 %v310
          %v603 = vunpack.c.l.b16 %v311
          %v604 = vunpack.c.h.b16 %v311
          %v605 = vunpack.c.l.b16 %v312
          %v606 = vunpack.c.h.b16 %v312
          %v607 = vunpack.c.l.b16 %v313
          %v608 = vunpack.c.h.b16 %v313
          %v609 = vunpack.c.l.b16 %v314
          %v610 = vunpack.c.h.b16 %v314
          %v611 = vunpack.c.l.b16 %v315
          %v612 = vunpack.c.h.b16 %v315
          %v613 = vunpack.c.l.b16 %v316
          %v614 = vunpack.c.h.b16 %v316
          %v615 = vunpack.c.l.b16 %v317
          %v616 = vunpack.c.h.b16 %v317
          %v617 = vunpack.c.l.b16 %v318
          %v618 = vunpack.c.h.b16 %v318
          %v619 = vunpack.c.l.b16 %v319
          %v620 = vunpack.c.h.b16 %v319
          %v621 = vunpack.c.l.b16 %v320
          %v622 = vunpack.c.h.b16 %v320
          %v623 = vunpack.c.l.b16 %v321
          %v624 = vunpack.c.h.b16 %v321
          %v625 = vunpack.c.l.b16 %v322
          %v626 = vunpack.c.h.b16 %v322
          %v627 = vpack.c.b16 %v599, %v595
          %v628 = vpack.c.b16 %v600, %v596
          %v629 = vpack.c.b16 %v601, %v597
          %v630 = vpack.c.b16 %v602, %v598
          %v631 = vpack.c.b16 %v607, %v603
          %v632 = vpack.c.b16 %v608, %v604
          %v633 = vpack.c.b16 %v609, %v605
          %v634 = vpack.c.b16 %v610, %v606
          %v635 = vpack.c.b16 %v615, %v611
          %v636 = vpack.c.b16 %v616, %v612
          %v637 = vpack.c.b16 %v617, %v613
          %v638 = vpack.c.b16 %v618, %v614
          %v639 = vpack.c.b16 %v623, %v619
          %v640 = vpack.c.b16 %v624, %v620
          %v641 = vpack.c.b16 %v625, %v621
          %v642 = vpack.c.b16 %v626, %v622
          %v660 = vsel %vm526, %v557, 0
          %662 = vmatprep.subr.bf16.mxu0 %v628
          %663 = vmatpush1.bf16.msra.mxu0 %v627
          %664 = vmatprep.subr.bf16.mxu0 %v632
          %665 = vmatpush1.bf16.msra.mxu0 %v631
          %666 = vmatprep.subr.bf16.mxu0 %v636
          %667 = vmatpush1.bf16.msra.mxu0 %v635
          %668 = vmatprep.subr.bf16.mxu0 %v640
          %669 = vmatpush1.bf16.msra.mxu0 %v639
          %670 = vmatprep.subr.bf16.mxu0 0
          %671 = vmatpush1.bf16.msra.mxu0 0
          %672 = vmatprep.subr.bf16.mxu0 0
          %673 = vmatpush1.bf16.msra.mxu0 0
          %674 = vmatprep.subr.bf16.mxu0 0
          %675 = vmatpush1.bf16.msra.mxu0 0
          %676 = vmatprep.subr.bf16.mxu0 0
          %677 = vmatpush1.bf16.msra.mxu0 0
          %678 = vmatprep.subr.bf16.mxu0 0
          %679 = vmatpush1.bf16.msra.mxu0 0
          %680 = vmatprep.subr.bf16.mxu0 0
          %681 = vmatpush1.bf16.msra.mxu0 0
          %682 = vmatprep.subr.bf16.mxu0 0
          %683 = vmatpush1.bf16.msra.mxu0 0
          %684 = vmatprep.subr.bf16.mxu0 0
          %685 = vmatpush1.bf16.msra.mxu0 0
          %686 = vmatprep.subr.bf16.mxu0 0
          %687 = vmatpush1.bf16.msra.mxu0 0
          %688 = vmatprep.subr.bf16.mxu0 0
          %689 = vmatpush1.bf16.msra.mxu0 0
          %690 = vmatprep.subr.bf16.mxu0 0
          %691 = vmatpush1.bf16.msra.mxu0 0
          %692 = vmatprep.subr.bf16.mxu0 0
          %693 = vmatpush1.bf16.msra.mxu0 0
          %694 = vmatprep.mubr.bf16.mxu0 0
          %695 = vmatmul.mubr.bf16.gmra.mrb[0].mxu0 %v660
          %v696 = vpop.f32.mrb[0].mxu0
          %v697 = vadd.f32 %v562, %v696
          %v698 = vpop.f32.mrb[0].mxu0
          %v699 = vadd.f32 %v566, %v698
          %v700 = vpop.f32.mrb[0].mxu0
          %v701 = vpop.f32.mrb[0].mxu0
          %702 = vdwg.mxu0
          %703 = vmatprep.subr.bf16.mxu0 %v630
          %704 = vmatpush1.bf16.msra.mxu0 %v629
          %705 = vmatprep.subr.bf16.mxu0 %v634
          %706 = vmatpush1.bf16.msra.mxu0 %v633
          %707 = vmatprep.subr.bf16.mxu0 %v638
          %708 = vmatpush1.bf16.msra.mxu0 %v637
          %709 = vmatprep.subr.bf16.mxu0 %v642
          %710 = vmatpush1.bf16.msra.mxu0 %v641
          %711 = vmatprep.subr.bf16.mxu0 0
          %712 = vmatpush1.bf16.msra.mxu0 0
          %713 = vmatprep.subr.bf16.mxu0 0
          %714 = vmatpush1.bf16.msra.mxu0 0
          %715 = vmatprep.subr.bf16.mxu0 0
          %716 = vmatpush1.bf16.msra.mxu0 0
          %717 = vmatprep.subr.bf16.mxu0 0
          %718 = vmatpush1.bf16.msra.mxu0 0
          %719 = vmatprep.subr.bf16.mxu0 0
          %720 = vmatpush1.bf16.msra.mxu0 0
          %721 = vmatprep.subr.bf16.mxu0 0
          %722 = vmatpush1.bf16.msra.mxu0 0
          %723 = vmatprep.subr.bf16.mxu0 0
          %724 = vmatpush1.bf16.msra.mxu0 0
          %725 = vmatprep.subr.bf16.mxu0 0
          %726 = vmatpush1.bf16.msra.mxu0 0
          %727 = vmatprep.subr.bf16.mxu0 0
          %728 = vmatpush1.bf16.msra.mxu0 0
          %729 = vmatprep.subr.bf16.mxu0 0
          %730 = vmatpush1.bf16.msra.mxu0 0
          %731 = vmatprep.subr.bf16.mxu0 0
          %732 = vmatpush1.bf16.msra.mxu0 0
          %733 = vmatprep.subr.bf16.mxu0 0
          %734 = vmatpush1.bf16.msra.mxu0 0
          %735 = vmatprep.mubr.bf16.mxu0 0
          %736 = vmatmul.mubr.bf16.gmra.mrb[0].mxu0 %v660
          %v737 = vpop.f32.mrb[0].mxu0
          %v738 = vadd.f32 %v570, %v737
          %v739 = vpop.f32.mrb[0].mxu0
          %v740 = vadd.f32 %v574, %v739
          %v741 = vpop.f32.mrb[0].mxu0
          %v742 = vpop.f32.mrb[0].mxu0
          %743 = vdwg.mxu0
          %744 = vst [vmem:[%s302] sm:$0xff] %v697
          %745 = vst [vmem:[%s302 + $0x8] sm:$0xff] %v699
          %746 = vst [vmem:[%s302 + $0x10] sm:$0xff] %v738
          %747 = vst [vmem:[%s302 + $0x18] sm:$0xff] %v740
        $region64: #{tpu_custom_call.1} parent=43 // pred_fallthru
          _
        %s748 = sand.u32 %s169, 1
        %s749 = scalar_lea.sflag [#allocation4], %s748
        %s750 = sand.u32 %s169, 1
        %s751 = smul.addr %s750, 32
        %s752 = scalar_lea.vmem [#allocation8], %s751
        // Predicated region
        $region65: #{tpu_custom_call.1} parent=43 // pred_check
          %p753 = pneg %p179
        $region66: #{tpu_custom_call.1} parent=43 // pred_check_branch
          %755 = sbr.rel (%p753) target = $region68
        $region67: #{tpu_custom_call.1} parent=43 // pred_region
          %s757 = ssub.s32 512, 512
          %758 = vsyncadd %s749, %s757
          %s759 = smul.addr %s24, 4
          %s760 = smul.addr %s759, 128
          %s761 = scalar_lea.hbm %s6, %s760
          %s763 = sshll.u32 %s752, 4
          %s764 = int_to_ptr.vmem [resolvable:$true] %s763
          %766 = dma.vmem_to_hbm [thread:$0]  %s764, 512, %s761, %s749
        $region68: #{tpu_custom_call.1} parent=43 // pred_fallthru
          _
      $region44: #{tpu_custom_call.1} parent=5 // pred_fallthru
        _
      %p767 = scmp.le.s32.totalorder 2, %s19
      // Predicated region
      $region69: #{tpu_custom_call.1} parent=5 // pred_check
        %p768 = pneg %p767
      $region70: #{tpu_custom_call.1} parent=5 // pred_check_branch
        %770 = sbr.rel (%p768) target = $region72
      $region71: #{tpu_custom_call.1} parent=5 // pred_region
        %s771 = ssub.s32 %s19, 2
        // Predicated region
        $region73: #{tpu_custom_call.1} parent=71 // pred_check
          %p772 = pneg %p185
        $region74: #{tpu_custom_call.1} parent=71 // pred_check_branch
          %774 = sbr.rel (%p772) target = $region76
        $region75: #{tpu_custom_call.1} parent=71 // pred_region
          %s775 = sand.u32 %s170, 1
          %s776 = scalar_lea.sflag [#allocation4], %s775
          %s777 = sand.u32 %s170, 1
          %s778 = smul.addr %s777, 32
          %s779 = scalar_lea.vmem [#allocation8], %s778
          %780 = dma.done %s776, 512
        $region76: #{tpu_custom_call.1} parent=71 // pred_fallthru
          _
      $region72: #{tpu_custom_call.1} parent=5 // pred_fallthru
        _
    $region6: #{tpu_custom_call.1} parent=1 // loop_footer
      %s23 = sadd.s32 1, %s19
    $region7: #{tpu_custom_call.1} parent=1 // loop_footer_branch
      %18 = sbr.rel target = $region3
    $region8: #{tpu_custom_call.1} parent=1 // loop_exit
      _
    %781 = vsyncpa [#allocation3], 1
    %s782 = scalar_lea.sflag [#allocation3], 1
    %783 = vsyncpa %s782, 1
    %784 = vsyncpa [#allocation6], 1
    %s785 = scalar_lea.sflag [#allocation6], 1
    %786 = vsyncpa %s785, 1
    %787 = vsyncpa [#allocation4], 1
    %s788 = scalar_lea.sflag [#allocation4], 1
    %789 = vsyncpa %s788, 1

</llo_original>
